<compile_context>
chip_gen: v5e
topology: v5e:2x2
jax: 0.10.0
libtpu: 0.0.40
codegen_flags: <defaults>
</compile_context>

<pallas_src>
import functools

import jax
import jax.numpy as jnp
from jax.experimental import pallas as pl
from jax.experimental.pallas import tpu as pltpu


def _round_up(a: int, b: int) -> int:
    return (a + b - 1) // b * b


def _cdiv(a: int, b: int) -> int:
    return (a + b - 1) // b


def _chip_config():
    """Generation-aware tile defaults + VMEM budget (with safe fallbacks)."""
    kind = ""
    try:
        kind = jax.devices()[0].device_kind.lower()
    except Exception:
        pass
    if "v7" in kind:
        cfg = dict(tm=512, tn=256, num_tc=2, vmem_phys=64 << 20)
    elif "v6" in kind:
        cfg = dict(tm=1024, tn=512, num_tc=1, vmem_phys=128 << 20)
    elif "v5" in kind:
        cfg = dict(tm=512, tn=512, num_tc=1, vmem_phys=128 << 20)
    else:  # v4 / unknown: conservative
        cfg = dict(tm=512, tn=512, num_tc=1, vmem_phys=64 << 20)
    try:  # prefer the hardware-reported number when available
        vmem = int(getattr(pltpu.get_tpu_info(), "vmem_capacity_bytes", 0))
        if vmem > 0:
            cfg["vmem_phys"] = vmem
    except Exception:
        pass
    # ~20% headroom for compiler-internal scratch / semaphores.
    cfg["vmem_budget"] = int(cfg["vmem_phys"] * 0.80)
    return cfg


def _vmem_footprint(tm, tn, d_model, x_size, w_size, o_size):
    """Bytes of VMEM one grid step needs (double-buffered tiles + scratch)."""
    tiles = (tm * d_model * x_size            # x tile
             + d_model * (2 * tn) * w_size    # fused w1||w2 tile
             + tn * d_model * w_size          # w3 tile
             + tm * d_model * o_size)         # output tile
    acc = tm * d_model * 4                    # f32 accumulator scratch
    # In-kernel temporaries: h12 (tm, 2tn) f32, g (tm, tn) f32, g in w dtype,
    # plus slack for layout copies.
    temps = tm * tn * (8 + 4 + w_size) + tm * tn * 4
    return 2 * tiles + acc + temps


def swiglu_kernel(x_ref, w12_ref, w3_ref, o_ref, acc_ref, *, tn):
    # x_ref:  (tm, d_model)   w12_ref: (d_model, 2*tn)   w3_ref: (tn, d_model)
    # o_ref:  (tm, d_model)   acc_ref: (tm, d_model) f32
    j = pl.program_id(1)

    x = x_ref[...]
    # Single MXU pass computes both projections (w1 block || w2 block).
    h12 = jnp.dot(x, w12_ref[...], preferred_element_type=jnp.float32)
    h1 = h12[:, :tn]
    h2 = h12[:, tn:]
    # SwiGLU gate in f32; the sigmoid runs on the EUP slot under the MXU.
    g = jax.nn.silu(h1) * h2
    partial = jnp.dot(g.astype(w3_ref.dtype), w3_ref[...],
                      preferred_element_type=jnp.float32)

    @pl.when(j == 0)
    def _():  # first partial product initializes the accumulator directly
        acc_ref[...] = partial

    @pl.when(j > 0)
    def _():
        acc_ref[...] += partial

    @pl.when(j == pl.num_programs(1) - 1)
    def _():
        o_ref[...] = acc_ref[...].astype(o_ref.dtype)


def swiglu_pallas(x, w1, w2, w3, *, tm=None, tn=None, compute_dtype=None):
    """Fused SwiGLU.  x: (..., d_model); w1,w2: (d_model, d_ff); w3: (d_ff, d_model).

    tm / tn override the generation-tuned row / hidden tile sizes.
    compute_dtype (e.g. jnp.bfloat16) casts x and weights before the MXU while
    keeping f32 accumulation; None keeps the caller's dtype exactly.
    """
    orig_shape = x.shape
    d_model = orig_shape[-1]
    d_ff = w1.shape[1]
    assert w1.shape == (d_model, d_ff) and w2.shape == (d_model, d_ff)
    assert w3.shape == (d_ff, d_model)

    out_dtype = x.dtype
    if compute_dtype is not None:
        x = x.astype(compute_dtype)
        w1 = w1.astype(compute_dtype)
        w2 = w2.astype(compute_dtype)
        w3 = w3.astype(compute_dtype)

    cfg = _chip_config()
    tm_req = int(tm) if tm is not None else cfg["tm"]
    tn_req = int(tn) if tn is not None else cfg["tn"]

    x2d = x.reshape(-1, d_model)
    M = x2d.shape[0]

    x_size = jnp.dtype(x.dtype).itemsize
    w_size = jnp.dtype(w1.dtype).itemsize
    o_size = jnp.dtype(out_dtype).itemsize
    # Sublane pack: 8 rows for 4-byte dtypes, 16 for bf16, 32 for int8/fp8.
    pack = max(8, 32 // max(x_size, 1))

    # ---- row tile ---------------------------------------------------------
    tm_sel = min(tm_req, _round_up(M, pack))
    if cfg["num_tc"] >= 2 and M >= 2 * pack:
        # Keep >= 2 programs on the parallel axis so both v7x TensorCores work.
        tm_sel = min(tm_sel, _round_up(_cdiv(M, 2), pack))
    tm_sel = max(pack, _round_up(tm_sel, pack))

    # ---- hidden (d_ff) tile ------------------------------------------------
    if d_ff <= tn_req:
        tn_sel = d_ff                       # single block, full dim
    else:
        nb = _cdiv(d_ff, tn_req)
        tn_sel = _round_up(_cdiv(d_ff, nb), 128)

    # ---- shrink to the chip's VMEM budget.  Shrink tn first: weight HBM
    # traffic per row tile is independent of tn, so arithmetic intensity
    # (the review's main concern) is preserved. ------------------------------
    budget = cfg["vmem_budget"]
    while _vmem_footprint(tm_sel, tn_sel, d_model, x_size, w_size, o_size) > budget:
        if tn_sel > 128:
            tn_sel = max(128, _round_up(tn_sel // 2, 128))
        elif tm_sel > pack:
            tm_sel = max(pack, _round_up(tm_sel // 2, pack))
        else:
            break

    if tn_sel >= d_ff:
        tn_sel = d_ff
        d_ff_pad = d_ff
    else:
        d_ff_pad = _round_up(d_ff, tn_sel)

    # ---- padding (exact no-op for SwiGLU) ----------------------------------
    M_pad = _round_up(M, tm_sel)
    if M_pad != M:
        x2d = jnp.pad(x2d, ((0, M_pad - M), (0, 0)))
    if d_ff_pad != d_ff:
        pad = d_ff_pad - d_ff
        w1 = jnp.pad(w1, ((0, 0), (0, pad)))
        w2 = jnp.pad(w2, ((0, 0), (0, pad)))
        w3 = jnp.pad(w3, ((0, pad), (0, 0)))

    nb = d_ff_pad // tn_sel
    # Fuse w1 and w2 into one per-block-interleaved slab: block j holds
    # [ w1[:, j*tn:(j+1)*tn] | w2[:, j*tn:(j+1)*tn] ]  -> one DMA stream.
    w12 = jnp.stack(
        [w1.reshape(d_model, nb, tn_sel), w2.reshape(d_model, nb, tn_sel)],
        axis=2,
    ).reshape(d_model, 2 * d_ff_pad)

    grid = (M_pad // tm_sel, nb)

    footprint = _vmem_footprint(tm_sel, tn_sel, d_model, x_size, w_size, o_size)
    vmem_limit = int(min(max(int(footprint * 1.25), 32 << 20),
                         max(int(cfg["vmem_phys"] * 0.9), footprint)))

    flops = 6 * M_pad * d_model * d_ff_pad        # x@w12 (4) + g@w3 (2) per element
    bytes_accessed = (M_pad * d_model * (x_size + o_size)
                      + grid[0] * 3 * d_model * d_ff_pad * w_size)
    cost = pl.CostEstimate(flops=int(flops),
                           transcendentals=int(M_pad * d_ff_pad),
                           bytes_accessed=int(bytes_accessed))

    kernel = functools.partial(swiglu_kernel, tn=tn_sel)
    out = pl.pallas_call(
        kernel,
        out_shape=jax.ShapeDtypeStruct((M_pad, d_model), out_dtype),
        grid_spec=pltpu.PrefetchScalarGridSpec(
            num_scalar_prefetch=0,
            grid=grid,
            in_specs=[
                pl.BlockSpec((tm_sel, d_model), lambda i, j: (i, 0)),      # x rows
                pl.BlockSpec((d_model, 2 * tn_sel), lambda i, j: (0, j)),  # w1||w2
                pl.BlockSpec((tn_sel, d_model), lambda i, j: (j, 0)),      # w3
            ],
            out_specs=pl.BlockSpec((tm_sel, d_model), lambda i, j: (i, 0)),
            scratch_shapes=[pltpu.VMEM((tm_sel, d_model), jnp.float32)],
        ),
        compiler_params=pltpu.CompilerParams(
            dimension_semantics=("parallel", "arbitrary"),
            vmem_limit_bytes=vmem_limit),
        cost_estimate=cost,
    )(x2d, w12, w3)

    if M_pad != M:
        out = out[:M]
    return out.reshape(orig_shape)


def swiglu_ref(x, w1, w2, w3):
    return (jax.nn.silu(x @ w1) * (x @ w2)) @ w3


def _make_inputs(key, batch, seq, d_model, d_ff):
    kx, k1, k2, k3, key = jax.random.split(key, 5)
    x = jax.random.normal(kx, (batch, seq, d_model), dtype=jnp.float32)
    b1 = 1.0 / (d_model ** 0.5)
    b3 = 1.0 / (d_ff ** 0.5)
    w1 = jax.random.uniform(k1, (d_model, d_ff), jnp.float32, -b1, b1)
    w2 = jax.random.uniform(k2, (d_model, d_ff), jnp.float32, -b1, b1)
    w3 = jax.random.uniform(k3, (d_ff, d_model), jnp.float32, -b3, b3)
    return key, x, w1, w2, w3


if __name__ == "__main__":
    key = jax.random.PRNGKey(0)

    # Case 1: module-consistent small shapes (single hidden block).
    key, x, w1, w2, w3 = _make_inputs(key, batch=2, seq=8, d_model=32, d_ff=64)
    y = swiglu_pallas(x, w1, w2, w3)
    jax.block_until_ready(y)
    assert y.shape == (2, 8, 32)
    assert jnp.allclose(y, swiglu_ref(x, w1, w2, w3), atol=1e-5, rtol=1e-5), "case 1 mismatch"

    # Case 2: row padding (M=200), two accumulation steps over d_ff, explicit tiles.
    key, x, w1, w2, w3 = _make_inputs(key, batch=2, seq=100, d_model=128, d_ff=512)
    y = swiglu_pallas(x, w1, w2, w3, tm=128, tn=256)
    jax.block_until_ready(y)
    assert y.shape == (2, 100, 128)
    assert jnp.allclose(y, swiglu_ref(x, w1, w2, w3), atol=1e-3, rtol=1e-3), "case 2 mismatch"

    # Case 3: generation-tuned default tiles + VMEM budgeting path.
    key, x, w1, w2, w3 = _make_inputs(key, batch=2, seq=128, d_model=256, d_ff=1024)
    y = swiglu_pallas(x, w1, w2, w3)
    jax.block_until_ready(y)
    assert y.shape == (2, 128, 256)
    assert jnp.allclose(y, swiglu_ref(x, w1, w2, w3), atol=2e-3, rtol=2e-3), "case 3 mismatch"

    print("KERNEL_OK")
</pallas_src>

<mosaic_0001>
module attributes {stable_mosaic.version = 11 : i64} {
  func.func @swiglu_kernel(%arg0: i32, %arg1: i32, %arg2: memref<16x32xf32, #tpu.memory_space<vmem>>, %arg3: memref<32x128xf32, #tpu.memory_space<vmem>>, %arg4: memref<64x32xf32, #tpu.memory_space<vmem>>, %arg5: memref<16x32xf32, #tpu.memory_space<vmem>>, %arg6: memref<16x32xf32, #tpu.memory_space<vmem>>) attributes {dimension_semantics = [#tpu.dimension_semantics<parallel>, #tpu.dimension_semantics<arbitrary>], iteration_bounds = array<i64: 1, 1>, scalar_prefetch = 0 : i64, scratch_operands = 1 : i64, tpu.core_type = #tpu.core_type<tc>, window_params = [{transform_indices = @transform_0, window_bounds = array<i64: 16, 32>}, {transform_indices = @transform_1, window_bounds = array<i64: 32, 128>}, {transform_indices = @transform_2, window_bounds = array<i64: 64, 32>}, {transform_indices = @transform_3, window_bounds = array<i64: 16, 32>}]} {
    %c0 = arith.constant 0 : index
    %c0_0 = arith.constant 0 : index
    %0 = vector.load %arg2[%c0, %c0_0] : memref<16x32xf32, #tpu.memory_space<vmem>>, vector<16x32xf32>
    %c0_1 = arith.constant 0 : index
    %c0_2 = arith.constant 0 : index
    %1 = vector.load %arg3[%c0_1, %c0_2] : memref<32x128xf32, #tpu.memory_space<vmem>>, vector<32x128xf32>
    %cst = arith.constant dense<0.000000e+00> : vector<16x128xf32>
    %2 = tpu.matmul %0, %1, %cst {dimension_numbers = #tpu.dot_dimension_numbers<[1], [0], [0], [1], [0, 0, 1, 1], [], []>} : vector<16x32xf32>, vector<32x128xf32>, vector<16x128xf32> -> vector<16x128xf32>
    %3 = vector.extract_strided_slice %2 {offsets = [0, 0], sizes = [16, 64], strides = [1, 1]} : vector<16x128xf32> to vector<16x64xf32>
    %4 = vector.extract_strided_slice %2 {offsets = [0, 64], sizes = [16, 64], strides = [1, 1]} : vector<16x128xf32> to vector<16x64xf32>
    %5 = arith.negf %3 : vector<16x64xf32>
    %6 = math.exp %5 : vector<16x64xf32>
    %cst_3 = arith.constant 1.000000e+00 : f32
    %7 = vector.broadcast %cst_3 : f32 to vector<16x64xf32>
    %8 = arith.addf %7, %6 : vector<16x64xf32>
    %9 = arith.divf %7, %8 : vector<16x64xf32>
    %10 = arith.mulf %3, %9 : vector<16x64xf32>
    %11 = arith.mulf %10, %4 : vector<16x64xf32>
    %c0_4 = arith.constant 0 : index
    %c0_5 = arith.constant 0 : index
    %12 = vector.load %arg4[%c0_4, %c0_5] : memref<64x32xf32, #tpu.memory_space<vmem>>, vector<64x32xf32>
    %cst_6 = arith.constant dense<0.000000e+00> : vector<16x32xf32>
    %13 = tpu.matmul %11, %12, %cst_6 {dimension_numbers = #tpu.dot_dimension_numbers<[1], [0], [0], [1], [0, 0, 1, 1], [], []>} : vector<16x64xf32>, vector<64x32xf32>, vector<16x32xf32> -> vector<16x32xf32>
    %c0_i32 = arith.constant 0 : i32
    %14 = arith.cmpi eq, %arg1, %c0_i32 : i32
    %15 = arith.extui %14 : i1 to i32
    %c0_i32_7 = arith.constant 0 : i32
    %16 = arith.cmpi ne, %15, %c0_i32_7 : i32
    scf.if %16 {
      %c0_12 = arith.constant 0 : index
      %c0_13 = arith.constant 0 : index
      %23 = vector.load %arg6[%c0_12, %c0_13] : memref<16x32xf32, #tpu.memory_space<vmem>>, vector<16x32xf32>
      tpu.vector_store %arg6[%c0_12, %c0_13], %13 {strides = array<i32>} : memref<16x32xf32, #tpu.memory_space<vmem>>, vector<16x32xf32>,
    } else {
    }
    %c0_i32_8 = arith.constant 0 : i32
    %17 = arith.cmpi sgt, %arg1, %c0_i32_8 : i32
    %18 = arith.extui %17 : i1 to i32
    %c0_i32_9 = arith.constant 0 : i32
    %19 = arith.cmpi ne, %18, %c0_i32_9 : i32
    scf.if %19 {
      %c0_12 = arith.constant 0 : index
      %c0_13 = arith.constant 0 : index
      %23 = vector.load %arg6[%c0_12, %c0_13] : memref<16x32xf32, #tpu.memory_space<vmem>>, vector<16x32xf32>
      %24 = arith.addf %23, %13 : vector<16x32xf32>
      %c0_14 = arith.constant 0 : index
      %c0_15 = arith.constant 0 : index
      %25 = vector.load %arg6[%c0_14, %c0_15] : memref<16x32xf32, #tpu.memory_space<vmem>>, vector<16x32xf32>
      tpu.vector_store %arg6[%c0_14, %c0_15], %24 {strides = array<i32>} : memref<16x32xf32, #tpu.memory_space<vmem>>, vector<16x32xf32>,
    } else {
    }
    %c0_i32_10 = arith.constant 0 : i32
    %20 = arith.cmpi eq, %arg1, %c0_i32_10 : i32
    %21 = arith.extui %20 : i1 to i32
    %c0_i32_11 = arith.constant 0 : i32
    %22 = arith.cmpi ne, %21, %c0_i32_11 : i32
    scf.if %22 {
      %c0_12 = arith.constant 0 : index
      %c0_13 = arith.constant 0 : index
      %23 = vector.load %arg6[%c0_12, %c0_13] : memref<16x32xf32, #tpu.memory_space<vmem>>, vector<16x32xf32>
      %c0_14 = arith.constant 0 : index
      %c0_15 = arith.constant 0 : index
      %24 = vector.load %arg5[%c0_14, %c0_15] : memref<16x32xf32, #tpu.memory_space<vmem>>, vector<16x32xf32>
      tpu.vector_store %arg5[%c0_14, %c0_15], %23 {strides = array<i32>} : memref<16x32xf32, #tpu.memory_space<vmem>>, vector<16x32xf32>,
    } else {
    }
    return
  }
  func.func @transform_0(%arg0: i32, %arg1: i32) -> (i32, i32) {
    %c0_i32 = arith.constant 0 : i32
    %c0_i32_0 = arith.constant 0 : i32
    return %arg0, %c0_i32 : i32, i32
  }
  func.func @transform_1(%arg0: i32, %arg1: i32) -> (i32, i32) {
    %c0_i32 = arith.constant 0 : i32
    %c0_i32_0 = arith.constant 0 : i32
    return %c0_i32, %arg1 : i32, i32
  }
  func.func @transform_2(%arg0: i32, %arg1: i32) -> (i32, i32) {
    %c0_i32 = arith.constant 0 : i32
    %c0_i32_0 = arith.constant 0 : i32
    return %arg1, %c0_i32 : i32, i32
  }
  func.func @transform_3(%arg0: i32, %arg1: i32) -> (i32, i32) {
    %c0_i32 = arith.constant 0 : i32
    %c0_i32_0 = arith.constant 0 : i32
    return %arg0, %c0_i32 : i32, i32
  }
}

</mosaic_0001>

<llo_original>
// kernel: tpu_custom_call.1
$region0: #{tpu_custom_call.1}
  #allocation0 [shape = 'u32[]', space=smem, size = 0x4, offset = 0x4, fixed_abs, tag = 'smem constant byte address 0x4 - core index']
  #allocation1 [shape = 'u32[72,128]{1,0:T(1,128)}', space=vmem, size = 0x9000, scoped, tag = 'internal scratch']
  #allocation2 [shape = 'f32[16,32]{1,0:T(8,128)}', space=vmem, size = 0x2000, scoped, tag = 'scratch operand']
  %s0 = inlined_call_operand.vmem [shape: f32[16,32], index: 0, kind: input, shape index: {}]
  %s1 = inlined_call_operand.vmem [shape: f32[32,128], index: 1, kind: input, shape index: {}]
  %s2 = inlined_call_operand.vmem [shape: f32[64,32], index: 2, kind: input, shape index: {}]
  %s3 = inlined_call_operand.hbm [shape: f32[16,32], index: 3, kind: output, shape index: {}]
  %s4 = sld [smem:[#allocation0]]
  $region34: #{tpu_custom_call.1} parent=0
    _
  %s6 = ssub.s32 1, %s4
  %s7 = scalar_select 0, %s6, %s4
  $region1: #{tpu_custom_call.1} parent=0
    #allocation3 [shape = 'u8[8192]{0}', space=vmem, size = 0x2000, scoped, tag = 'output window, operand 0, single buffered']
    #allocation4 [shape = 's32[1]{0}', space=sflag, size = 0x4, scoped, tag = 'scoped memory for tpu_custom_call.1']
    %8 = vsyncpa [#allocation4], 0
    // Predicated region
    $region2: #{tpu_custom_call.1} parent=1 // pred_check
      _
    $region3: #{tpu_custom_call.1} parent=1 // pred_check_branch
      %10 = sbr.rel (0) target = $region5
    $region4: #{tpu_custom_call.1} parent=1 // pred_region
      _
    $region5: #{tpu_custom_call.1} parent=1 // pred_fallthru
      _
    // Predicated region
    $region6: #{tpu_custom_call.1} parent=1 // pred_check
      _
    $region7: #{tpu_custom_call.1} parent=1 // pred_check_branch
      %12 = sbr.rel (0) target = $region9
    $region8: #{tpu_custom_call.1} parent=1 // pred_region
      _
    $region9: #{tpu_custom_call.1} parent=1 // pred_fallthru
      _
    // Predicated region
    $region10: #{tpu_custom_call.1} parent=1 // pred_check
      _
    $region11: #{tpu_custom_call.1} parent=1 // pred_check_branch
      %14 = sbr.rel (0) target = $region13
    $region12: #{tpu_custom_call.1} parent=1 // pred_region
      _
    $region13: #{tpu_custom_call.1} parent=1 // pred_fallthru
      _
    %v15 = vld [vmem:[%s0] sm:$0xff]
    %v16 = vld [vmem:[%s0 + $0x8] sm:$0xff]
    %v17 = vld [vmem:[%s1] sm:$0xff]
    %v18 = vld [vmem:[%s1 + $0x8] sm:$0xff]
    %v19 = vld [vmem:[%s1 + $0x10] sm:$0xff]
    %v20 = vld [vmem:[%s1 + $0x18] sm:$0xff]
    %vm21 = vcmask 261120
    %v23 = vsel %vm21, %v15, 0
    %v26 = vsel %vm21, %v16, 0
    %28 = vmatpush.msra.mxu0 0.0
    %29 = vmatpush.msra.mxu0 0.0
    %30 = vmatpush.msra.mxu0 0.0
    %31 = vmatpush.msra.mxu0 0.0
    %32 = vmatpush.msra.mxu0 0.0
    %33 = vmatpush.msra.mxu0 0.0
    %34 = vmatpush.msra.mxu0 0.0
    %35 = vmatpush.msra.mxu0 0.0
    %36 = vmatpush.msra.mxu0 0.0
    %37 = vmatpush.msra.mxu0 0.0
    %38 = vmatpush.msra.mxu0 0.0
    %39 = vmatpush.msra.mxu0 0.0
    %40 = vmatpush.msra.mxu0 %v20
    %41 = vmatpush.msra.mxu0 %v19
    %42 = vmatpush.msra.mxu0 %v18
    %43 = vmatpush.msra.mxu0 %v17
    %44 = vmatmul.f32.gmra.mxu0 %v23
    %v45 = vpop.f32.mrf.mxu0
    %v46 = vadd.f32 0.0, %v45
    %47 = vmatmul.f32.gmra.mxu0 %v26
    %v48 = vpop.f32.mrf.mxu0
    %v49 = vadd.f32 0.0, %v48
    %50 = vdwg.mxu0
    %v51 = vxor.u32 %v46, 2147483648
    %v52 = vxor.u32 %v49, 2147483648
    %v53 = vmul.f32 %v51, 1.442695
    %v54 = vpow.pop %v53
    %v55 = vmul.f32 %v52, 1.442695
    %v56 = vpow.pop %v55
    %v57 = vadd.f32 %v54, 1.0
    %v58 = vadd.f32 %v56, 1.0
    %v59 = vrcp.pop %v57
    %v60 = vmul.f32 %v57, %v59
    %v61 = vsub.f32 1.0, %v60
    %v62 = vmul.f32 %v59, %v61
    %v63 = vadd.f32 %v59, %v62
    %vm64 = vweird.f32 %v57
    %vm65 = vweird.f32 %v59
    %vm66 = vmor %vm64, %vm65
    %v67 = vsel %vm66, %v59, %v63
    %v68 = vand.u32 2147483647, %v57
    %vm69 = vcmp.eq.f32.partialorder %v68, 8.507059e+37
    %v70 = vand.u32 %v57, 2147483648
    %v71 = vor.u32 1.1754944e-38, %v70
    %v72 = vsel %vm69, %v71, %v67
    %v73 = vmul.f32 1.0, %v72
    %v74 = vrcp.pop %v58
    %v75 = vmul.f32 %v58, %v74
    %v76 = vsub.f32 1.0, %v75
    %v77 = vmul.f32 %v74, %v76
    %v78 = vadd.f32 %v74, %v77
    %vm79 = vweird.f32 %v58
    %vm80 = vweird.f32 %v74
    %vm81 = vmor %vm79, %vm80
    %v82 = vsel %vm81, %v74, %v78
    %v83 = vand.u32 2147483647, %v58
    %vm84 = vcmp.eq.f32.partialorder %v83, 8.507059e+37
    %v85 = vand.u32 %v58, 2147483648
    %v86 = vor.u32 1.1754944e-38, %v85
    %v87 = vsel %vm84, %v86, %v82
    %v88 = vmul.f32 1.0, %v87
    %v89 = vmul.f32 %v46, %v73
    %v90 = vmul.f32 %v49, %v88
    %93 = vrot.lane.b32.xlu0 %v46, 64
    %v94 = vpop.permute.xlu0 %93
    %95 = vrot.lane.b32.xlu0 %v49, 64
    %v96 = vpop.permute.xlu0 %95
    %v99 = vmul.f32 %v89, %v94
    %v100 = vmul.f32 %v90, %v96
    %v101 = vld [vmem:[%s2] sm:$0xff]
    %v102 = vld [vmem:[%s2 + $0x8] sm:$0xff]
    %v103 = vld [vmem:[%s2 + $0x10] sm:$0xff]
    %v104 = vld [vmem:[%s2 + $0x18] sm:$0xff]
    %v105 = vld [vmem:[%s2 + $0x20] sm:$0xff]
    %v106 = vld [vmem:[%s2 + $0x28] sm:$0xff]
    %v107 = vld [vmem:[%s2 + $0x30] sm:$0xff]
    %v108 = vld [vmem:[%s2 + $0x38] sm:$0xff]
    %vm109 = vcmask 523264
    %v111 = vsel %vm109, %v99, 0
    %v114 = vsel %vm109, %v100, 0
    %116 = vmatpush.msra.mxu0 0.0
    %117 = vmatpush.msra.mxu0 0.0
    %118 = vmatpush.msra.mxu0 0.0
    %119 = vmatpush.msra.mxu0 0.0
    %120 = vmatpush.msra.mxu0 0.0
    %121 = vmatpush.msra.mxu0 0.0
    %122 = vmatpush.msra.mxu0 0.0
    %123 = vmatpush.msra.mxu0 0.0
    %124 = vmatpush.msra.mxu0 %v108
    %125 = vmatpush.msra.mxu0 %v107
    %126 = vmatpush.msra.mxu0 %v106
    %127 = vmatpush.msra.mxu0 %v105
    %128 = vmatpush.msra.mxu0 %v104
    %129 = vmatpush.msra.mxu0 %v103
    %130 = vmatpush.msra.mxu0 %v102
    %131 = vmatpush.msra.mxu0 %v101
    %132 = vmatmul.f32.gmra.mxu0 %v111
    %v133 = vpop.f32.mrf.mxu0
    %v134 = vadd.f32 0.0, %v133
    %135 = vmatmul.f32.gmra.mxu0 %v114
    %v136 = vpop.f32.mrf.mxu0
    %v137 = vadd.f32 0.0, %v136
    %138 = vdwg.mxu0
    %p139 = scmp.eq.s32.totalorder 0, 0
    // Predicated region
    $region14: #{tpu_custom_call.1} parent=1 // pred_check
      %p140 = pneg %p139
    $region15: #{tpu_custom_call.1} parent=1 // pred_check_branch
      %142 = sbr.rel (%p140) target = $region17
    $region16: #{tpu_custom_call.1} parent=1 // pred_region
      %143 = vst.msk [vmem:[#allocation2] sm:$0xff] %vm21, %v134
      %144 = vst.msk [vmem:[#allocation2 + $0x8] sm:$0xff] %vm21, %v137
    $region17: #{tpu_custom_call.1} parent=1 // pred_fallthru
      _
    %p145 = scmp.gt.s32.totalorder 0, 0
    // Predicated region
    $region18: #{tpu_custom_call.1} parent=1 // pred_check
      %p146 = pneg %p145
    $region19: #{tpu_custom_call.1} parent=1 // pred_check_branch
      %148 = sbr.rel (%p146) target = $region21
    $region20: #{tpu_custom_call.1} parent=1 // pred_region
      %v149 = vld [vmem:[#allocation2] sm:$0xff]
      %v150 = vld [vmem:[#allocation2 + $0x8] sm:$0xff]
      %v151 = vadd.f32 %v149, %v134
      %v152 = vadd.f32 %v150, %v137
      %153 = vst.msk [vmem:[#allocation2] sm:$0xff] %vm21, %v151
      %154 = vst.msk [vmem:[#allocation2 + $0x8] sm:$0xff] %vm21, %v152
    $region21: #{tpu_custom_call.1} parent=1 // pred_fallthru
      _
    // Predicated region
    $region22: #{tpu_custom_call.1} parent=1 // pred_check
      %p155 = pneg %p139
    $region23: #{tpu_custom_call.1} parent=1 // pred_check_branch
      %157 = sbr.rel (%p155) target = $region25
    $region24: #{tpu_custom_call.1} parent=1 // pred_region
      %v158 = vld [vmem:[#allocation2] sm:$0xff]
      %v159 = vld [vmem:[#allocation2 + $0x8] sm:$0xff]
      %160 = vst.msk [vmem:[#allocation3] sm:$0xff] %vm21, %v158
      %161 = vst.msk [vmem:[#allocation3 + $0x8] sm:$0xff] %vm21, %v159
    $region25: #{tpu_custom_call.1} parent=1 // pred_fallthru
      _
    // Predicated region
    $region26: #{tpu_custom_call.1} parent=1 // pred_check
      _
    $region27: #{tpu_custom_call.1} parent=1 // pred_check_branch
      %163 = sbr.rel (0) target = $region29
    $region28: #{tpu_custom_call.1} parent=1 // pred_region
      %165 = vsyncadd [#allocation4], 0
      %s166 = sshll.u32 [#allocation3], 4
      %s167 = int_to_ptr.vmem [resolvable:$true] %s166
      %s168 = sshll.u32 %s3, 4
      %s169 = int_to_ptr.hbm [resolvable:$true] %s168
      %174 = dma.vmem_to_hbm [thread:$0]  %s167, 256, %s169, [#allocation4], 128, 128, 8
    $region29: #{tpu_custom_call.1} parent=1 // pred_fallthru
      _
    // Predicated region
    $region30: #{tpu_custom_call.1} parent=1 // pred_check
      _
    $region31: #{tpu_custom_call.1} parent=1 // pred_check_branch
      %176 = sbr.rel (0) target = $region33
    $region32: #{tpu_custom_call.1} parent=1 // pred_region
      %178 = dma.done [#allocation4], 256
    $region33: #{tpu_custom_call.1} parent=1 // pred_fallthru
      _
    %179 = vsyncpa [#allocation4], 1

</llo_original>
